<compile_context>
chip_gen: v6e
topology: v6e:2x2x1
jax: 0.10.0
libtpu: 0.0.40
codegen_flags: <defaults>
</compile_context>

<pallas_src>
import jax
import jax.numpy as jnp
from jax.experimental import pallas as pl
from jax.experimental.pallas import tpu as pltpu

LANE = 128  # TPU vreg lane width


def _round_up(x, m):
    return ((x + m - 1) // m) * m


# ----------------------------------------------------------------------------
# Fused Pallas kernel: conv1 + ReLU + conv2 + log_softmax
# ----------------------------------------------------------------------------
def _gcn_fused_kernel(a_ref, x_ref, w1_ref, b1_ref, w2_ref, b2_ref, o_ref):
    a = a_ref[...]                                    # [N, N]    bf16
    x = x_ref[...].astype(jnp.bfloat16)               # [N, Fin]  f32 -> bf16 in-kernel

    # ---- layer 1:  relu( (A_hat @ X) @ W1 + b1 ) --------------------------
    # N^2 matmul contracts the small input-feature dim; K=Fin=16 on the W1 dot.
    ax = jnp.dot(a, x, preferred_element_type=jnp.float32)           # [N, Fin] f32
    h = jnp.dot(ax.astype(jnp.bfloat16), w1_ref[...],
                preferred_element_type=jnp.float32) + b1_ref[...]    # [N, Dp]  f32
    h = jnp.maximum(h, 0.0)
    # F.dropout(x, training=False) is the identity at inference.
    # TODO(synk): training-mode dropout (random mask) not implemented.

    # ---- layer 2:  A_hat @ (h @ W2) + b2 ----------------------------------
    # b2's padded class lanes are pre-baked to -1e30, so no in-kernel mask.
    hw = jnp.dot(h.astype(jnp.bfloat16), w2_ref[...],
                 preferred_element_type=jnp.float32)                 # [N, Cp] f32
    logits = jnp.dot(a, hw.astype(jnp.bfloat16),
                     preferred_element_type=jnp.float32) + b2_ref[...]

    # ---- log_softmax epilogue (padded lanes are ~-1e30 -> exp() == 0) -----
    m = jnp.max(logits, axis=-1, keepdims=True)
    s = logits - m
    lse = jnp.log(jnp.sum(jnp.exp(s), axis=-1, keepdims=True))
    o_ref[...] = (s - lse).astype(o_ref.dtype)                       # lane-dense store


# ----------------------------------------------------------------------------
# Wrapper / glue
# ----------------------------------------------------------------------------
def build_normalized_adjacency(edge_index, num_nodes, dtype=jnp.float32):
    """Dense GCN adjacency: A_hat = D^-1/2 (A + I_remaining) D^-1/2.

    Matches PyG gcn_norm: self-loops are only added for nodes that do not
    already have one (add_remaining_self_loops)."""
    src, dst = edge_index[0], edge_index[1]
    a = jnp.zeros((num_nodes, num_nodes), dtype)
    a = a.at[dst, src].add(1.0)                       # A[target, source] += 1
    idx = jnp.arange(num_nodes)
    a = a.at[idx, idx].set(jnp.maximum(a[idx, idx], 1.0))   # remaining self-loops
    deg = jnp.sum(a, axis=1)
    d_inv_sqrt = jnp.where(deg > 0, 1.0 / jnp.sqrt(deg), 0.0)
    return a * d_inv_sqrt[:, None] * d_inv_sqrt[None, :]


def glorot(key, shape, dtype=jnp.float32):
    fan_in, fan_out = shape
    limit = jnp.sqrt(6.0 / (fan_in + fan_out))
    return jax.random.uniform(key, shape, dtype, minval=-limit, maxval=limit)


def init_params(key, num_node_features, dim, num_classes):
    k1, k2 = jax.random.split(key)
    return {
        "w1": glorot(k1, (num_node_features, dim)),
        "b1": jnp.zeros((dim,), jnp.float32),
        "w2": glorot(k2, (dim, num_classes)),
        "b2": jnp.zeros((num_classes,), jnp.float32),
    }


def prepare_params(params):
    """One-time prep (hoisted out of the per-call path):
      * W1 kept at [Fin, Dp] (Fin=16 is a legal bf16 sublane pack) so x needs
        no wrapper-side padding.
      * Hidden/class dims padded to 128 lanes; weights cast to bf16.
      * b2's padded class lanes baked to -1e30 => class mask is free in-kernel.
      * Biases reshaped to [1, D] broadcast rows."""
    fin, dim = params["w1"].shape
    _, nc = params["w2"].shape
    dp, cp = _round_up(dim, LANE), _round_up(nc, LANE)

    w1 = jnp.zeros((fin, dp), jnp.bfloat16).at[:, :dim].set(
        params["w1"].astype(jnp.bfloat16))
    b1 = jnp.zeros((1, dp), jnp.float32).at[0, :dim].set(params["b1"])
    w2 = jnp.zeros((dp, cp), jnp.bfloat16).at[:dim, :nc].set(
        params["w2"].astype(jnp.bfloat16))
    b2 = jnp.full((1, cp), -1e30, jnp.float32).at[0, :nc].set(params["b2"])
    return {"w1": w1, "b1": b1, "w2": w2, "b2": b2, "num_classes": nc}


@jax.jit
def gcn_net_forward(a_hat_bf16, x, w1, b1, w2, b2):
    """Returns lane-dense padded log-probs [N, 128]; columns >= num_classes hold
    ~-1e30 (exp == 0).  The narrow slice is left to the consumer on purpose."""
    n = x.shape[0]
    cp = w2.shape[1]
    return pl.pallas_call(
        _gcn_fused_kernel,
        out_shape=jax.ShapeDtypeStruct((n, cp), jnp.float32),
        in_specs=[pl.BlockSpec(memory_space=pltpu.MemorySpace.VMEM)] * 6,
        out_specs=pl.BlockSpec(memory_space=pltpu.MemorySpace.VMEM),
    )(a_hat_bf16, x, w1, b1, w2, b2)


def gcn_reference_f32(a_hat, x, params):
    """Pure-JAX f32 reference of the PyTorch forward (inference mode)."""
    h = jnp.maximum(a_hat @ x @ params["w1"] + params["b1"], 0.0)
    logits = a_hat @ h @ params["w2"] + params["b2"]
    return jax.nn.log_softmax(logits, axis=1)


# ----------------------------------------------------------------------------
# Main
# ----------------------------------------------------------------------------
if __name__ == "__main__":
    info = {
        "num_node_features": 16,
        "num_classes": 8,
        "is_regression": False,
        "is_edge_pred": False,
    }
    N = 64       # number of graph nodes
    DIM = 32     # hidden dim (fixed to 32 in the module)

    key = jax.random.PRNGKey(0)
    k_x, k_p = jax.random.split(key)

    # Node features [N, F].
    x = jax.random.normal(k_x, (N, info["num_node_features"]), jnp.float32)

    # Deterministic edge_index [2, E]: undirected ring (both directions).
    idx = jnp.arange(N, dtype=jnp.int32)
    nxt = (idx + 1) % N
    edge_index = jnp.concatenate(
        [jnp.stack([idx, nxt], axis=0), jnp.stack([nxt, idx], axis=0)], axis=1
    )

    a_hat = build_normalized_adjacency(edge_index, N)
    a_hat_bf16 = a_hat.astype(jnp.bfloat16)          # hoisted one-time cast

    params = init_params(k_p, info["num_node_features"], DIM, info["num_classes"])
    prep = prepare_params(params)                    # pad + bf16 + mask-bake, once

    out_pad = gcn_net_forward(
        a_hat_bf16, x, prep["w1"], prep["b1"], prep["w2"], prep["b2"])
    jax.block_until_ready(out_pad)

    nc = info["num_classes"]
    assert out_pad.shape == (N, LANE)

    # Consumer-side slice to logical classes.
    out = out_pad[:, :nc]
    assert out.shape == (N, nc)

    # Rows of log_softmax must sum (in prob space) to 1; padded lanes exp to 0,
    # so the check holds on the padded output too.
    assert jnp.allclose(jnp.sum(jnp.exp(out_pad), axis=1), 1.0, atol=1e-4)

    # Compare against an f32 pure-JAX reference (bf16 MXU inputs -> loose tol).
    ref = gcn_reference_f32(a_hat, x, params)
    assert jnp.allclose(out, ref, atol=0.1), float(jnp.max(jnp.abs(out - ref)))

    print("KERNEL_OK")
</pallas_src>

<mosaic_0001>
module attributes {stable_mosaic.version = 11 : i64} {
  func.func @_gcn_fused_kernel(%arg0: memref<64x64xbf16, #tpu.memory_space<vmem>>, %arg1: memref<64x16xf32, #tpu.memory_space<vmem>>, %arg2: memref<16x128xbf16, #tpu.memory_space<vmem>>, %arg3: memref<1x128xf32, #tpu.memory_space<vmem>>, %arg4: memref<128x128xbf16, #tpu.memory_space<vmem>>, %arg5: memref<1x128xf32, #tpu.memory_space<vmem>>, %arg6: memref<64x128xf32, #tpu.memory_space<vmem>>) attributes {dimension_semantics = [], scalar_prefetch = 0 : i64, scratch_operands = 0 : i64, tpu.core_type = #tpu.core_type<tc>} {
    %c0 = arith.constant 0 : index
    %c0_0 = arith.constant 0 : index
    %0 = vector.load %arg0[%c0, %c0_0] : memref<64x64xbf16, #tpu.memory_space<vmem>>, vector<64x64xbf16>
    %c0_1 = arith.constant 0 : index
    %c0_2 = arith.constant 0 : index
    %1 = vector.load %arg1[%c0_1, %c0_2] : memref<64x16xf32, #tpu.memory_space<vmem>>, vector<64x16xf32>
    %2 = arith.truncf %1 : vector<64x16xf32> to vector<64x16xbf16>
    %cst = arith.constant dense<0.000000e+00> : vector<64x16xf32>
    %3 = tpu.matmul %0, %2, %cst {dimension_numbers = #tpu.dot_dimension_numbers<[1], [0], [0], [1], [0, 0, 1, 1], [], []>} : vector<64x64xbf16>, vector<64x16xbf16>, vector<64x16xf32> -> vector<64x16xf32>
    %4 = arith.truncf %3 : vector<64x16xf32> to vector<64x16xbf16>
    %c0_3 = arith.constant 0 : index
    %c0_4 = arith.constant 0 : index
    %5 = vector.load %arg2[%c0_3, %c0_4] : memref<16x128xbf16, #tpu.memory_space<vmem>>, vector<16x128xbf16>
    %cst_5 = arith.constant dense<0.000000e+00> : vector<64x128xf32>
    %6 = tpu.matmul %4, %5, %cst_5 {dimension_numbers = #tpu.dot_dimension_numbers<[1], [0], [0], [1], [0, 0, 1, 1], [], []>} : vector<64x16xbf16>, vector<16x128xbf16>, vector<64x128xf32> -> vector<64x128xf32>
    %c0_6 = arith.constant 0 : index
    %c0_7 = arith.constant 0 : index
    %7 = vector.load %arg3[%c0_6, %c0_7] : memref<1x128xf32, #tpu.memory_space<vmem>>, vector<1x128xf32>
    %8 = vector.broadcast %7 : vector<1x128xf32> to vector<64x128xf32>
    %9 = arith.addf %6, %8 : vector<64x128xf32>
    %cst_8 = arith.constant 0.000000e+00 : f32
    %10 = vector.broadcast %cst_8 : f32 to vector<64x128xf32>
    %11 = arith.maximumf %9, %10 : vector<64x128xf32>
    %12 = arith.truncf %11 : vector<64x128xf32> to vector<64x128xbf16>
    %c0_9 = arith.constant 0 : index
    %c0_10 = arith.constant 0 : index
    %13 = vector.load %arg4[%c0_9, %c0_10] : memref<128x128xbf16, #tpu.memory_space<vmem>>, vector<128x128xbf16>
    %cst_11 = arith.constant dense<0.000000e+00> : vector<64x128xf32>
    %14 = tpu.matmul %12, %13, %cst_11 {dimension_numbers = #tpu.dot_dimension_numbers<[1], [0], [0], [1], [0, 0, 1, 1], [], []>} : vector<64x128xbf16>, vector<128x128xbf16>, vector<64x128xf32> -> vector<64x128xf32>
    %15 = arith.truncf %14 : vector<64x128xf32> to vector<64x128xbf16>
    %cst_12 = arith.constant dense<0.000000e+00> : vector<64x128xf32>
    %16 = tpu.matmul %0, %15, %cst_12 {dimension_numbers = #tpu.dot_dimension_numbers<[1], [0], [0], [1], [0, 0, 1, 1], [], []>} : vector<64x64xbf16>, vector<64x128xbf16>, vector<64x128xf32> -> vector<64x128xf32>
    %c0_13 = arith.constant 0 : index
    %c0_14 = arith.constant 0 : index
    %17 = vector.load %arg5[%c0_13, %c0_14] : memref<1x128xf32, #tpu.memory_space<vmem>>, vector<1x128xf32>
    %18 = vector.broadcast %17 : vector<1x128xf32> to vector<64x128xf32>
    %19 = arith.addf %16, %18 : vector<64x128xf32>
    %cst_15 = arith.constant dense<0xFF800000> : vector<64xf32>
    %20 = vector.multi_reduction <maximumf>, %19, %cst_15 [1] : vector<64x128xf32> to vector<64xf32>
    %21 = vector.shape_cast %20 : vector<64xf32> to vector<64x1xf32>
    %22 = vector.broadcast %21 : vector<64x1xf32> to vector<64x128xf32>
    %23 = arith.subf %19, %22 : vector<64x128xf32>
    %24 = math.exp %23 : vector<64x128xf32>
    %cst_16 = arith.constant dense<0.000000e+00> : vector<64xf32>
    %25 = vector.multi_reduction <add>, %24, %cst_16 [1] : vector<64x128xf32> to vector<64xf32>
    %26 = vector.shape_cast %25 : vector<64xf32> to vector<64x1xf32>
    %27 = math.log %26 : vector<64x1xf32>
    %28 = vector.broadcast %27 : vector<64x1xf32> to vector<64x128xf32>
    %29 = arith.subf %23, %28 : vector<64x128xf32>
    %c0_17 = arith.constant 0 : index
    %c0_18 = arith.constant 0 : index
    %30 = vector.load %arg6[%c0_17, %c0_18] : memref<64x128xf32, #tpu.memory_space<vmem>>, vector<64x128xf32>
    tpu.vector_store %arg6[%c0_17, %c0_18], %29 {strides = array<i32>} : memref<64x128xf32, #tpu.memory_space<vmem>>, vector<64x128xf32>,
    return
  }
}

</mosaic_0001>

<llo_original>
// kernel: gcn_net_forward.1
$region0: #{gcn_net_forward.1}
  #allocation0 [shape = 'u32[]', space=smem, size = 0x4, offset = 0x4, fixed_abs, tag = 'smem constant byte address 0x4 - core index']
  #allocation1 [shape = 'u32[144,128]{1,0:T(1,128)}', space=vmem, size = 0x12000, scoped, tag = 'internal scratch']
  %s0 = inlined_call_operand.hbm [shape: bf16[64,64], index: 0, kind: input, shape index: {}]
  %s1 = inlined_call_operand.vmem [shape: f32[64,16], index: 1, kind: input, shape index: {}]
  %s2 = inlined_call_operand.vmem [shape: bf16[16,128], index: 2, kind: input, shape index: {}]
  %s3 = inlined_call_operand.vmem [shape: f32[1,128], index: 3, kind: input, shape index: {}]
  %s4 = inlined_call_operand.vmem [shape: bf16[128,128], index: 4, kind: input, shape index: {}]
  %s5 = inlined_call_operand.vmem [shape: f32[1,128], index: 5, kind: input, shape index: {}]
  %s6 = inlined_call_operand.hbm [shape: f32[64,128], index: 6, kind: output, shape index: {}]
  %s7 = sld [smem:[#allocation0]]
  $region38: #{gcn_net_forward.1} parent=0
    _
  %s9 = ssub.s32 1, %s7
  %s10 = scalar_select 0, %s9, %s7
  $region1: #{gcn_net_forward.1} parent=0
    #allocation2 [shape = 'u8[16384]{0}', space=vmem, size = 0x4000, scoped, tag = 'input window, operand 0, single buffered']
    #allocation3 [shape = 's32[1]{0}', space=sflag, size = 0x4, scoped, tag = 'scoped memory for gcn_net_forward.1']
    #allocation4 [shape = 's32[1]{0}', space=sflag, size = 0x4, scoped, tag = 'scoped memory for gcn_net_forward.1']
    #allocation5 [shape = 'u8[32768]{0}', space=vmem, size = 0x8000, scoped, tag = 'output window, operand 0, single buffered']
    %11 = vsyncpa [#allocation3], 0
    %12 = vsyncpa [#allocation4], 0
    // Predicated region
    $region2: #{gcn_net_forward.1} parent=1 // pred_check
      _
    $region3: #{gcn_net_forward.1} parent=1 // pred_check_branch
      %14 = sbr.rel (0) target = $region5
    $region4: #{gcn_net_forward.1} parent=1 // pred_region
      %s16 = ssub.s32 512, 512
      %17 = vsyncadd [#allocation3], %s16
      %s18 = sshll.u32 [#allocation2], 4
      %s19 = int_to_ptr.vmem [resolvable:$true] %s18
      %24 = dma.hbm_to_vmem [thread:$0]  %s0, 512, %s19, [#allocation3], 64, 64, 4
    $region5: #{gcn_net_forward.1} parent=1 // pred_fallthru
      _
    // Predicated region
    $region6: #{gcn_net_forward.1} parent=1 // pred_check
      _
    $region7: #{gcn_net_forward.1} parent=1 // pred_check_branch
      %26 = sbr.rel (0) target = $region9
    $region8: #{gcn_net_forward.1} parent=1 // pred_region
      _
    $region9: #{gcn_net_forward.1} parent=1 // pred_fallthru
      _
    // Predicated region
    $region10: #{gcn_net_forward.1} parent=1 // pred_check
      _
    $region11: #{gcn_net_forward.1} parent=1 // pred_check_branch
      %28 = sbr.rel (0) target = $region13
    $region12: #{gcn_net_forward.1} parent=1 // pred_region
      _
    $region13: #{gcn_net_forward.1} parent=1 // pred_fallthru
      _
    // Predicated region
    $region14: #{gcn_net_forward.1} parent=1 // pred_check
      _
    $region15: #{gcn_net_forward.1} parent=1 // pred_check_branch
      %30 = sbr.rel (0) target = $region17
    $region16: #{gcn_net_forward.1} parent=1 // pred_region
      _
    $region17: #{gcn_net_forward.1} parent=1 // pred_fallthru
      _
    // Predicated region
    $region18: #{gcn_net_forward.1} parent=1 // pred_check
      _
    $region19: #{gcn_net_forward.1} parent=1 // pred_check_branch
      %32 = sbr.rel (0) target = $region21
    $region20: #{gcn_net_forward.1} parent=1 // pred_region
      _
    $region21: #{gcn_net_forward.1} parent=1 // pred_fallthru
      _
    // Predicated region
    $region22: #{gcn_net_forward.1} parent=1 // pred_check
      _
    $region23: #{gcn_net_forward.1} parent=1 // pred_check_branch
      %34 = sbr.rel (0) target = $region25
    $region24: #{gcn_net_forward.1} parent=1 // pred_region
      _
    $region25: #{gcn_net_forward.1} parent=1 // pred_fallthru
      _
    // Predicated region
    $region26: #{gcn_net_forward.1} parent=1 // pred_check
      _
    $region27: #{gcn_net_forward.1} parent=1 // pred_check_branch
      %36 = sbr.rel (0) target = $region29
    $region28: #{gcn_net_forward.1} parent=1 // pred_region
      %37 = dma.done [#allocation3], 512
    $region29: #{gcn_net_forward.1} parent=1 // pred_fallthru
      _
    %v39 = vld [vmem:[#allocation2] sm:$0xf]
    %v40 = vld [vmem:[#allocation2 + $0x4] sm:$0xf]
    %v41 = vld [vmem:[#allocation2 + $0x8] sm:$0xf]
    %v42 = vld [vmem:[#allocation2 + $0xc] sm:$0xf]
    %v43 = vld [vmem:[#allocation2 + $0x10] sm:$0xf]
    %v44 = vld [vmem:[#allocation2 + $0x14] sm:$0xf]
    %v45 = vld [vmem:[#allocation2 + $0x18] sm:$0xf]
    %v46 = vld [vmem:[#allocation2 + $0x1c] sm:$0xf]
    %v47 = vld [vmem:[%s1] sm:$0xff]
    %v48 = vld [vmem:[%s1 + $0x8] sm:$0xff]
    %v49 = vld [vmem:[%s1 + $0x10] sm:$0xff]
    %v50 = vld [vmem:[%s1 + $0x18] sm:$0xff]
    %v51 = vld [vmem:[%s1 + $0x20] sm:$0xff]
    %v52 = vld [vmem:[%s1 + $0x28] sm:$0xff]
    %v53 = vld [vmem:[%s1 + $0x30] sm:$0xff]
    %v54 = vld [vmem:[%s1 + $0x38] sm:$0xff]
    %v55 = vpack.c.bf16 %v48, %v47
    %v56 = vpack.c.bf16 %v50, %v49
    %v57 = vpack.c.bf16 %v52, %v51
    %v58 = vpack.c.bf16 %v54, %v53
    %v67 = vunpack.c.l.b16 %v39
    %v68 = vunpack.c.l.b16 %v40
    %v69 = vunpack.c.l.b16 %v41
    %v70 = vunpack.c.l.b16 %v42
    %v71 = vunpack.c.l.b16 %v43
    %v72 = vunpack.c.l.b16 %v44
    %v73 = vunpack.c.l.b16 %v45
    %v74 = vunpack.c.l.b16 %v46
    %v75 = vpack.c.b16 %v68, %v67
    %v76 = vpack.c.b16 %v70, %v69
    %v77 = vpack.c.b16 %v72, %v71
    %v78 = vpack.c.b16 %v74, %v73
    %vm79 = vcmask 523264
    %v81 = vsel %vm79, %v75, 0
    %v84 = vsel %vm79, %v76, 0
    %v87 = vsel %vm79, %v77, 0
    %v90 = vsel %vm79, %v78, 0
    %92 = vmatprep.subr.bf16.mxu0 0
    %93 = vmatpush1.bf16.msra.mxu0 0
    %94 = vmatprep.subr.bf16.mxu0 0
    %95 = vmatpush1.bf16.msra.mxu0 0
    %96 = vmatprep.subr.bf16.mxu0 0
    %97 = vmatpush1.bf16.msra.mxu0 0
    %98 = vmatprep.subr.bf16.mxu0 0
    %99 = vmatpush1.bf16.msra.mxu0 0
    %100 = vmatprep.subr.bf16.mxu0 0
    %101 = vmatpush1.bf16.msra.mxu0 %v58
    %102 = vmatprep.subr.bf16.mxu0 0
    %103 = vmatpush1.bf16.msra.mxu0 %v57
    %104 = vmatprep.subr.bf16.mxu0 0
    %105 = vmatpush1.bf16.msra.mxu0 %v56
    %106 = vmatprep.subr.bf16.mxu0 0
    %107 = vmatpush1.bf16.msra.mxu0 %v55
    %108 = vmatprep.subr.bf16.mxu0 0
    %109 = vmatpush2.bf16.msra.mxu0 0
    %110 = vmatprep.subr.bf16.mxu0 0
    %111 = vmatpush2.bf16.msra.mxu0 0
    %112 = vmatprep.subr.bf16.mxu0 0
    %113 = vmatpush2.bf16.msra.mxu0 0
    %114 = vmatprep.subr.bf16.mxu0 0
    %115 = vmatpush2.bf16.msra.mxu0 0
    %116 = vmatprep.subr.bf16.mxu0 0
    %117 = vmatpush2.bf16.msra.mxu0 0
    %118 = vmatprep.subr.bf16.mxu0 0
    %119 = vmatpush2.bf16.msra.mxu0 0
    %120 = vmatprep.subr.bf16.mxu0 0
    %121 = vmatpush2.bf16.msra.mxu0 0
    %122 = vmatprep.subr.bf16.mxu0 0
    %123 = vmatpush2.bf16.msra.mxu0 0
    %124 = vmatprep.mubr.bf16.mxu0 0
    %125 = vmatmul.mubr.bf16.gmra.mxu0 %v81
    %v126 = vpop.f32.mrf.mxu0
    %v127 = vadd.f32 0.0, %v126
    %v128 = vpop.f32.mrf.mxu0
    %v129 = vpop.f32.mrf.mxu0
    %v130 = vadd.f32 0.0, %v129
    %v131 = vpop.f32.mrf.mxu0
    %132 = vmatprep.mubr.bf16.mxu0 0
    %133 = vmatmul.mubr.bf16.gmra.mxu0 %v84
    %v134 = vpop.f32.mrf.mxu0
    %v135 = vadd.f32 0.0, %v134
    %v136 = vpop.f32.mrf.mxu0
    %v137 = vpop.f32.mrf.mxu0
    %v138 = vadd.f32 0.0, %v137
    %v139 = vpop.f32.mrf.mxu0
    %140 = vmatprep.mubr.bf16.mxu0 0
    %141 = vmatmul.mubr.bf16.gmra.mxu0 %v87
    %v142 = vpop.f32.mrf.mxu0
    %v143 = vadd.f32 0.0, %v142
    %v144 = vpop.f32.mrf.mxu0
    %v145 = vpop.f32.mrf.mxu0
    %v146 = vadd.f32 0.0, %v145
    %v147 = vpop.f32.mrf.mxu0
    %148 = vmatprep.mubr.bf16.mxu0 0
    %149 = vmatmul.mubr.bf16.gmra.mxu0 %v90
    %v150 = vpop.f32.mrf.mxu0
    %v151 = vadd.f32 0.0, %v150
    %v152 = vpop.f32.mrf.mxu0
    %v153 = vpop.f32.mrf.mxu0
    %v154 = vadd.f32 0.0, %v153
    %v155 = vpop.f32.mrf.mxu0
    %156 = vdwg.mxu0
    %v157 = vpack.c.bf16 %v130, %v127
    %v158 = vpack.c.bf16 %v138, %v135
    %v159 = vpack.c.bf16 %v146, %v143
    %v160 = vpack.c.bf16 %v154, %v151
    %v161 = vld [vmem:[%s2] sm:$0xf]
    %v162 = vld [vmem:[%s2 + $0x4] sm:$0xf]
    %v163 = vld [vmem:[%s3] sm:$0x1]
    %v165 = vlaneseq
    %v166 = vshrl.u32 %v165, 7
    %v167 = vsub.s32 0, %v166
    %v168 = vrot.slane %v163, %v167
    %v172 = vunpack.c.l.b16 %v161
    %v173 = vunpack.c.l.b16 %v162
    %v174 = vpack.c.b16 %v173, %v172
    %vm176 = vcmask 130048
    %v178 = vsel %vm176, %v157, 0
    %v181 = vsel %vm176, %v158, 0
    %v184 = vsel %vm176, %v159, 0
    %v187 = vsel %vm176, %v160, 0
    %189 = vmatprep.subr.bf16.mxu0 0
    %190 = vmatpush1.bf16.msra.mxu0 0
    %191 = vmatprep.subr.bf16.mxu0 0
    %192 = vmatpush1.bf16.msra.mxu0 0
    %193 = vmatprep.subr.bf16.mxu0 0
    %194 = vmatpush1.bf16.msra.mxu0 0
    %195 = vmatprep.subr.bf16.mxu0 0
    %196 = vmatpush1.bf16.msra.mxu0 0
    %197 = vmatprep.subr.bf16.mxu0 0
    %198 = vmatpush1.bf16.msra.mxu0 0
    %199 = vmatprep.subr.bf16.mxu0 0
    %200 = vmatpush1.bf16.msra.mxu0 0
    %201 = vmatprep.subr.bf16.mxu0 0
    %202 = vmatpush1.bf16.msra.mxu0 0
    %203 = vmatprep.subr.bf16.mxu0 0
    %204 = vmatpush1.bf16.msra.mxu0 %v174
    %205 = vmatprep.subr.bf16.mxu0 0
    %206 = vmatpush2.bf16.msra.mxu0 0
    %207 = vmatprep.subr.bf16.mxu0 0
    %208 = vmatpush2.bf16.msra.mxu0 0
    %209 = vmatprep.subr.bf16.mxu0 0
    %210 = vmatpush2.bf16.msra.mxu0 0
    %211 = vmatprep.subr.bf16.mxu0 0
    %212 = vmatpush2.bf16.msra.mxu0 0
    %213 = vmatprep.subr.bf16.mxu0 0
    %214 = vmatpush2.bf16.msra.mxu0 0
    %215 = vmatprep.subr.bf16.mxu0 0
    %216 = vmatpush2.bf16.msra.mxu0 0
    %217 = vmatprep.subr.bf16.mxu0 0
    %218 = vmatpush2.bf16.msra.mxu0 0
    %219 = vmatprep.subr.bf16.mxu0 0
    %220 = vmatpush2.bf16.msra.mxu0 0
    %221 = vmatprep.mubr.bf16.mxu0 0
    %222 = vmatmul.mubr.bf16.gmra.mxu0 %v178
    %v223 = vpop.f32.mrf.mxu0
    %v224 = vadd.f32 %v168, %v223
    %v225 = vpop.f32.mrf.mxu0
    %v226 = vpop.f32.mrf.mxu0
    %v227 = vadd.f32 %v168, %v226
    %v228 = vpop.f32.mrf.mxu0
    %229 = vmatprep.mubr.bf16.mxu0 0
    %230 = vmatmul.mubr.bf16.gmra.mxu0 %v181
    %v231 = vpop.f32.mrf.mxu0
    %v232 = vadd.f32 %v168, %v231
    %v233 = vpop.f32.mrf.mxu0
    %v234 = vpop.f32.mrf.mxu0
    %v235 = vadd.f32 %v168, %v234
    %v236 = vpop.f32.mrf.mxu0
    %237 = vmatprep.mubr.bf16.mxu0 0
    %238 = vmatmul.mubr.bf16.gmra.mxu0 %v184
    %v239 = vpop.f32.mrf.mxu0
    %v240 = vadd.f32 %v168, %v239
    %v241 = vpop.f32.mrf.mxu0
    %v242 = vpop.f32.mrf.mxu0
    %v243 = vadd.f32 %v168, %v242
    %v244 = vpop.f32.mrf.mxu0
    %245 = vmatprep.mubr.bf16.mxu0 0
    %246 = vmatmul.mubr.bf16.gmra.mxu0 %v187
    %v247 = vpop.f32.mrf.mxu0
    %v248 = vadd.f32 %v168, %v247
    %v249 = vpop.f32.mrf.mxu0
    %v250 = vpop.f32.mrf.mxu0
    %v251 = vadd.f32 %v168, %v250
    %v252 = vpop.f32.mrf.mxu0
    %253 = vdwg.mxu0
    %v254 = vmax.f32 %v224, 0.0
    %v255 = vmax.f32 %v227, 0.0
    %v256 = vmax.f32 %v232, 0.0
    %v257 = vmax.f32 %v235, 0.0
    %v258 = vmax.f32 %v240, 0.0
    %v259 = vmax.f32 %v243, 0.0
    %v260 = vmax.f32 %v248, 0.0
    %v261 = vmax.f32 %v251, 0.0
    %v262 = vpack.c.bf16 %v255, %v254
    %v263 = vpack.c.bf16 %v257, %v256
    %v264 = vpack.c.bf16 %v259, %v258
    %v265 = vpack.c.bf16 %v261, %v260
    %v266 = vld [vmem:[%s4] sm:$0xf]
    %v267 = vld [vmem:[%s4 + $0x4] sm:$0xf]
    %v268 = vld [vmem:[%s4 + $0x8] sm:$0xf]
    %v269 = vld [vmem:[%s4 + $0xc] sm:$0xf]
    %v270 = vld [vmem:[%s4 + $0x10] sm:$0xf]
    %v271 = vld [vmem:[%s4 + $0x14] sm:$0xf]
    %v272 = vld [vmem:[%s4 + $0x18] sm:$0xf]
    %v273 = vld [vmem:[%s4 + $0x1c] sm:$0xf]
    %v274 = vld [vmem:[%s4 + $0x20] sm:$0xf]
    %v275 = vld [vmem:[%s4 + $0x24] sm:$0xf]
    %v276 = vld [vmem:[%s4 + $0x28] sm:$0xf]
    %v277 = vld [vmem:[%s4 + $0x2c] sm:$0xf]
    %v278 = vld [vmem:[%s4 + $0x30] sm:$0xf]
    %v279 = vld [vmem:[%s4 + $0x34] sm:$0xf]
    %v280 = vld [vmem:[%s4 + $0x38] sm:$0xf]
    %v281 = vld [vmem:[%s4 + $0x3c] sm:$0xf]
    %v298 = vunpack.c.l.b16 %v266
    %v299 = vunpack.c.l.b16 %v267
    %v300 = vunpack.c.l.b16 %v268
    %v301 = vunpack.c.l.b16 %v269
    %v302 = vunpack.c.l.b16 %v270
    %v303 = vunpack.c.l.b16 %v271
    %v304 = vunpack.c.l.b16 %v272
    %v305 = vunpack.c.l.b16 %v273
    %v306 = vunpack.c.l.b16 %v274
    %v307 = vunpack.c.l.b16 %v275
    %v308 = vunpack.c.l.b16 %v276
    %v309 = vunpack.c.l.b16 %v277
    %v310 = vunpack.c.l.b16 %v278
    %v311 = vunpack.c.l.b16 %v279
    %v312 = vunpack.c.l.b16 %v280
    %v313 = vunpack.c.l.b16 %v281
    %v314 = vpack.c.b16 %v299, %v298
    %v315 = vpack.c.b16 %v301, %v300
    %v316 = vpack.c.b16 %v303, %v302
    %v317 = vpack.c.b16 %v305, %v304
    %v318 = vpack.c.b16 %v307, %v306
    %v319 = vpack.c.b16 %v309, %v308
    %v320 = vpack.c.b16 %v311, %v310
    %v321 = vpack.c.b16 %v313, %v312
    %330 = vmatprep.subr.bf16.mxu0 0
    %331 = vmatpush1.bf16.msra.mxu0 %v321
    %332 = vmatprep.subr.bf16.mxu0 0
    %333 = vmatpush1.bf16.msra.mxu0 %v320
    %334 = vmatprep.subr.bf16.mxu0 0
    %335 = vmatpush1.bf16.msra.mxu0 %v319
    %336 = vmatprep.subr.bf16.mxu0 0
    %337 = vmatpush1.bf16.msra.mxu0 %v318
    %338 = vmatprep.subr.bf16.mxu0 0
    %339 = vmatpush1.bf16.msra.mxu0 %v317
    %340 = vmatprep.subr.bf16.mxu0 0
    %341 = vmatpush1.bf16.msra.mxu0 %v316
    %342 = vmatprep.subr.bf16.mxu0 0
    %343 = vmatpush1.bf16.msra.mxu0 %v315
    %344 = vmatprep.subr.bf16.mxu0 0
    %345 = vmatpush1.bf16.msra.mxu0 %v314
    %346 = vmatprep.subr.bf16.mxu0 0
    %347 = vmatpush2.bf16.msra.mxu0 0
    %348 = vmatprep.subr.bf16.mxu0 0
    %349 = vmatpush2.bf16.msra.mxu0 0
    %350 = vmatprep.subr.bf16.mxu0 0
    %351 = vmatpush2.bf16.msra.mxu0 0
    %352 = vmatprep.subr.bf16.mxu0 0
    %353 = vmatpush2.bf16.msra.mxu0 0
    %354 = vmatprep.subr.bf16.mxu0 0
    %355 = vmatpush2.bf16.msra.mxu0 0
    %356 = vmatprep.subr.bf16.mxu0 0
    %357 = vmatpush2.bf16.msra.mxu0 0
    %358 = vmatprep.subr.bf16.mxu0 0
    %359 = vmatpush2.bf16.msra.mxu0 0
    %360 = vmatprep.subr.bf16.mxu0 0
    %361 = vmatpush2.bf16.msra.mxu0 0
    %362 = vmatprep.mubr.bf16.mxu0 0
    %363 = vmatmul.mubr.bf16.gmra.mxu0 %v262
    %v364 = vpop.f32.mrf.mxu0
    %v365 = vadd.f32 0.0, %v364
    %v366 = vpop.f32.mrf.mxu0
    %v367 = vpop.f32.mrf.mxu0
    %v368 = vadd.f32 0.0, %v367
    %v369 = vpop.f32.mrf.mxu0
    %370 = vmatprep.mubr.bf16.mxu0 0
    %371 = vmatmul.mubr.bf16.gmra.mxu0 %v263
    %v372 = vpop.f32.mrf.mxu0
    %v373 = vadd.f32 0.0, %v372
    %v374 = vpop.f32.mrf.mxu0
    %v375 = vpop.f32.mrf.mxu0
    %v376 = vadd.f32 0.0, %v375
    %v377 = vpop.f32.mrf.mxu0
    %378 = vmatprep.mubr.bf16.mxu0 0
    %379 = vmatmul.mubr.bf16.gmra.mxu0 %v264
    %v380 = vpop.f32.mrf.mxu0
    %v381 = vadd.f32 0.0, %v380
    %v382 = vpop.f32.mrf.mxu0
    %v383 = vpop.f32.mrf.mxu0
    %v384 = vadd.f32 0.0, %v383
    %v385 = vpop.f32.mrf.mxu0
    %386 = vmatprep.mubr.bf16.mxu0 0
    %387 = vmatmul.mubr.bf16.gmra.mxu0 %v265
    %v388 = vpop.f32.mrf.mxu0
    %v389 = vadd.f32 0.0, %v388
    %v390 = vpop.f32.mrf.mxu0
    %v391 = vpop.f32.mrf.mxu0
    %v392 = vadd.f32 0.0, %v391
    %v393 = vpop.f32.mrf.mxu0
    %394 = vdwg.mxu0
    %v395 = vpack.c.bf16 %v368, %v365
    %v396 = vpack.c.bf16 %v376, %v373
    %v397 = vpack.c.bf16 %v384, %v381
    %v398 = vpack.c.bf16 %v392, %v389
    %v399 = vld [vmem:[%s5] sm:$0x1]
    %v401 = vlaneseq
    %v402 = vshrl.u32 %v401, 7
    %v403 = vsub.s32 0, %v402
    %v404 = vrot.slane %v399, %v403
    %406 = vmatprep.subr.bf16.mxu0 0
    %407 = vmatpush1.bf16.msra.mxu0 0
    %408 = vmatprep.subr.bf16.mxu0 0
    %409 = vmatpush1.bf16.msra.mxu0 0
    %410 = vmatprep.subr.bf16.mxu0 0
    %411 = vmatpush1.bf16.msra.mxu0 0
    %412 = vmatprep.subr.bf16.mxu0 0
    %413 = vmatpush1.bf16.msra.mxu0 0
    %414 = vmatprep.subr.bf16.mxu0 0
    %415 = vmatpush1.bf16.msra.mxu0 %v398
    %416 = vmatprep.subr.bf16.mxu0 0
    %417 = vmatpush1.bf16.msra.mxu0 %v397
    %418 = vmatprep.subr.bf16.mxu0 0
    %419 = vmatpush1.bf16.msra.mxu0 %v396
    %420 = vmatprep.subr.bf16.mxu0 0
    %421 = vmatpush1.bf16.msra.mxu0 %v395
    %422 = vmatprep.subr.bf16.mxu0 0
    %423 = vmatpush2.bf16.msra.mxu0 0
    %424 = vmatprep.subr.bf16.mxu0 0
    %425 = vmatpush2.bf16.msra.mxu0 0
    %426 = vmatprep.subr.bf16.mxu0 0
    %427 = vmatpush2.bf16.msra.mxu0 0
    %428 = vmatprep.subr.bf16.mxu0 0
    %429 = vmatpush2.bf16.msra.mxu0 0
    %430 = vmatprep.subr.bf16.mxu0 0
    %431 = vmatpush2.bf16.msra.mxu0 0
    %432 = vmatprep.subr.bf16.mxu0 0
    %433 = vmatpush2.bf16.msra.mxu0 0
    %434 = vmatprep.subr.bf16.mxu0 0
    %435 = vmatpush2.bf16.msra.mxu0 0
    %436 = vmatprep.subr.bf16.mxu0 0
    %437 = vmatpush2.bf16.msra.mxu0 0
    %438 = vmatprep.mubr.bf16.mxu0 0
    %439 = vmatmul.mubr.bf16.gmra.mxu0 %v81
    %v440 = vpop.f32.mrf.mxu0
    %v441 = vadd.f32 %v404, %v440
    %v442 = vpop.f32.mrf.mxu0
    %v443 = vpop.f32.mrf.mxu0
    %v444 = vadd.f32 %v404, %v443
    %v445 = vpop.f32.mrf.mxu0
    %446 = vmatprep.mubr.bf16.mxu0 0
    %447 = vmatmul.mubr.bf16.gmra.mxu0 %v84
    %v448 = vpop.f32.mrf.mxu0
    %v449 = vadd.f32 %v404, %v448
    %v450 = vpop.f32.mrf.mxu0
    %v451 = vpop.f32.mrf.mxu0
    %v452 = vadd.f32 %v404, %v451
    %v453 = vpop.f32.mrf.mxu0
    %454 = vmatprep.mubr.bf16.mxu0 0
    %455 = vmatmul.mubr.bf16.gmra.mxu0 %v87
    %v456 = vpop.f32.mrf.mxu0
    %v457 = vadd.f32 %v404, %v456
    %v458 = vpop.f32.mrf.mxu0
    %v459 = vpop.f32.mrf.mxu0
    %v460 = vadd.f32 %v404, %v459
    %v461 = vpop.f32.mrf.mxu0
    %462 = vmatprep.mubr.bf16.mxu0 0
    %463 = vmatmul.mubr.bf16.gmra.mxu0 %v90
    %v464 = vpop.f32.mrf.mxu0
    %v465 = vadd.f32 %v404, %v464
    %v466 = vpop.f32.mrf.mxu0
    %v467 = vpop.f32.mrf.mxu0
    %v468 = vadd.f32 %v404, %v467
    %v469 = vpop.f32.mrf.mxu0
    %470 = vdwg.mxu0
    %471 = vmax.xlane.f32.xlu0 %v441
    %v472 = vpop.xlane.xlu0 %471
    %473 = vmax.xlane.f32.xlu0 %v444
    %v474 = vpop.xlane.xlu0 %473
    %475 = vmax.xlane.f32.xlu0 %v449
    %v476 = vpop.xlane.xlu0 %475
    %477 = vmax.xlane.f32.xlu0 %v452
    %v478 = vpop.xlane.xlu0 %477
    %479 = vmax.xlane.f32.xlu0 %v457
    %v480 = vpop.xlane.xlu0 %479
    %481 = vmax.xlane.f32.xlu0 %v460
    %v482 = vpop.xlane.xlu0 %481
    %483 = vmax.xlane.f32.xlu0 %v465
    %v484 = vpop.xlane.xlu0 %483
    %485 = vmax.xlane.f32.xlu0 %v468
    %v486 = vpop.xlane.xlu0 %485
    %v487 = vsub.f32 %v441, %v472
    %v488 = vsub.f32 %v444, %v474
    %v489 = vsub.f32 %v449, %v476
    %v490 = vsub.f32 %v452, %v478
    %v491 = vsub.f32 %v457, %v480
    %v492 = vsub.f32 %v460, %v482
    %v493 = vsub.f32 %v465, %v484
    %v494 = vsub.f32 %v468, %v486
    %v495 = vmul.f32 %v487, 1.442695
    %v496 = vpow.pop %v495
    %v497 = vmul.f32 %v488, 1.442695
    %v498 = vpow.pop %v497
    %v499 = vmul.f32 %v489, 1.442695
    %v500 = vpow.pop %v499
    %v501 = vmul.f32 %v490, 1.442695
    %v502 = vpow.pop %v501
    %v503 = vmul.f32 %v491, 1.442695
    %v504 = vpow.pop %v503
    %v505 = vmul.f32 %v492, 1.442695
    %v506 = vpow.pop %v505
    %v507 = vmul.f32 %v493, 1.442695
    %v508 = vpow.pop %v507
    %v509 = vmul.f32 %v494, 1.442695
    %v510 = vpow.pop %v509
    %511 = vadd.xlane.f32.xlu0 %v496
    %v512 = vpop.xlane.xlu0 %511
    %513 = vadd.xlane.f32.xlu0 %v498
    %v514 = vpop.xlane.xlu0 %513
    %515 = vadd.xlane.f32.xlu0 %v500
    %v516 = vpop.xlane.xlu0 %515
    %517 = vadd.xlane.f32.xlu0 %v502
    %v518 = vpop.xlane.xlu0 %517
    %519 = vadd.xlane.f32.xlu0 %v504
    %v520 = vpop.xlane.xlu0 %519
    %521 = vadd.xlane.f32.xlu0 %v506
    %v522 = vpop.xlane.xlu0 %521
    %523 = vadd.xlane.f32.xlu0 %v508
    %v524 = vpop.xlane.xlu0 %523
    %525 = vadd.xlane.f32.xlu0 %v510
    %v526 = vpop.xlane.xlu0 %525
    %v527 = vlog2.pop %v512
    %v528 = vmul.f32 %v527, 0.6931472
    %v529 = vlog2.pop %v514
    %v530 = vmul.f32 %v529, 0.6931472
    %v531 = vlog2.pop %v516
    %v532 = vmul.f32 %v531, 0.6931472
    %v533 = vlog2.pop %v518
    %v534 = vmul.f32 %v533, 0.6931472
    %v535 = vlog2.pop %v520
    %v536 = vmul.f32 %v535, 0.6931472
    %v537 = vlog2.pop %v522
    %v538 = vmul.f32 %v537, 0.6931472
    %v539 = vlog2.pop %v524
    %v540 = vmul.f32 %v539, 0.6931472
    %v541 = vlog2.pop %v526
    %v542 = vmul.f32 %v541, 0.6931472
    %v543 = vsub.f32 %v487, %v528
    %v544 = vsub.f32 %v488, %v530
    %v545 = vsub.f32 %v489, %v532
    %v546 = vsub.f32 %v490, %v534
    %v547 = vsub.f32 %v491, %v536
    %v548 = vsub.f32 %v492, %v538
    %v549 = vsub.f32 %v493, %v540
    %v550 = vsub.f32 %v494, %v542
    %551 = vst [vmem:[#allocation5] sm:$0xff] %v543
    %552 = vst [vmem:[#allocation5 + $0x8] sm:$0xff] %v544
    %553 = vst [vmem:[#allocation5 + $0x10] sm:$0xff] %v545
    %554 = vst [vmem:[#allocation5 + $0x18] sm:$0xff] %v546
    %555 = vst [vmem:[#allocation5 + $0x20] sm:$0xff] %v547
    %556 = vst [vmem:[#allocation5 + $0x28] sm:$0xff] %v548
    %557 = vst [vmem:[#allocation5 + $0x30] sm:$0xff] %v549
    %558 = vst [vmem:[#allocation5 + $0x38] sm:$0xff] %v550
    // Predicated region
    $region30: #{gcn_net_forward.1} parent=1 // pred_check
      _
    $region31: #{gcn_net_forward.1} parent=1 // pred_check_branch
      %560 = sbr.rel (0) target = $region33
    $region32: #{gcn_net_forward.1} parent=1 // pred_region
      %s562 = ssub.s32 1024, 1024
      %563 = vsyncadd [#allocation4], %s562
      %s564 = sshll.u32 [#allocation5], 4
      %s565 = int_to_ptr.vmem [resolvable:$true] %s564
      %570 = dma.vmem_to_hbm [thread:$0]  %s565, 1024, %s6, [#allocation4], 128, 128, 8
    $region33: #{gcn_net_forward.1} parent=1 // pred_fallthru
      _
    // Predicated region
    $region34: #{gcn_net_forward.1} parent=1 // pred_check
      _
    $region35: #{gcn_net_forward.1} parent=1 // pred_check_branch
      %572 = sbr.rel (0) target = $region37
    $region36: #{gcn_net_forward.1} parent=1 // pred_region
      %573 = dma.done [#allocation4], 1024
    $region37: #{gcn_net_forward.1} parent=1 // pred_fallthru
      _
    %574 = vsyncpa [#allocation3], 1
    %575 = vsyncpa [#allocation4], 1

</llo_original>
